<compile_context>
chip_gen: v7x
topology: tpu7x:2x2x1
jax: 0.10.0
libtpu: 0.0.40
codegen_flags: <defaults>
</compile_context>

<pallas_src>
import functools

import jax
import jax.numpy as jnp
from jax.experimental import pallas as pl
from jax.experimental.pallas import tpu as pltpu


def _linear_kernel(x_ref, w_ref, b_ref, o_ref):
    # x_ref: (tb, dim) VMEM input tile (auto-pipelined over the batch grid)
    # w_ref: (1, dim)  VMEM weight row, resident across all grid steps
    # b_ref: (1, 1)    SMEM scalar bias
    # o_ref: (1, tb)   VMEM lane-dense output row
    #
    # Contract the minor (dim) axes of both operands: (1, dim) x (tb, dim)
    # -> (1, tb). This is the MXU-native form (no transposes / relayouts),
    # and the result is already lane-dense, so stores are full-width vst.
    y = jax.lax.dot_general(
        w_ref[...], x_ref[...],
        dimension_numbers=(((1,), (1,)), ((), ())),
        preferred_element_type=jnp.float32,
    )
    o_ref[...] = (y + b_ref[0, 0]).astype(o_ref.dtype)


def _vmem_capacity_bytes():
    # Generation-aware VMEM capacity (64 MiB on v7x, 128 MiB on v5e/v6e).
    try:
        return int(pltpu.get_tpu_info().vmem_capacity_bytes)
    except Exception:
        return 64 * 1024 * 1024  # conservative default (v7x)


@functools.partial(jax.jit, static_argnames=("small_threshold",))
def linear_forward(x, weight, bias, *, small_threshold=1 << 20):
    """Pallas equivalent of nn.Linear(dim, 1): returns x @ weight.T + bias.

    x:      (batch, dim) float32
    weight: (1, dim)     float32  (PyTorch convention: (out_features, in_features))
    bias:   (1,)         float32
    out:    (batch, 1)   float32
    """
    batch, dim = x.shape

    # Fast path: for small/medium inputs XLA's fused dot is already near the
    # HBM roofline; the pallas_call launch + pipeline setup only pays off once
    # streaming x from HBM dominates (>~1M elements, i.e. ~4 MiB of input).
    if batch * dim <= small_threshold:
        return x @ weight.T + bias

    # --- Pick the batch tile (by bytes, generation-aware) -------------------
    capacity = _vmem_capacity_bytes()
    # Per-buffer x-tile target: ~4 MiB on v7x (64 MiB VMEM), ~8 MiB on v5e/v6e.
    target_tile_bytes = min(8 << 20, max(2 << 20, capacity // 16))
    bytes_per_row = dim * 4  # f32
    rows_cap = (target_tile_bytes // bytes_per_row) // 128 * 128
    # Keep tb a multiple of 128 (lane-dense output rows) and guarantee >= 2
    # grid steps so the "parallel" axis shards across both v7x TensorCores.
    half = (batch // 2) // 128 * 128
    tb = min(rows_cap, half)
    if tb < 128:
        # Batch too small for two 128-row tiles, or dim too wide for the VMEM
        # budget. This matvec is memory-bound, so XLA is near roofline here.
        # TODO(synk): add a K-tiled (dim-split) accumulator path for very wide dim.
        return x @ weight.T + bias

    num_tiles = batch // tb        # >= 2
    main = num_tiles * tb          # largest tb-divisible prefix (no pad copy)
    tail = batch - main            # 0 <= tail < tb, handled by XLA below

    b2d = bias.reshape(1, 1).astype(jnp.float32)  # scalar bias -> SMEM

    x_tile_bytes = tb * dim * 4
    # double-buffered x + double-buffered output row + resident weight
    needed = 2 * x_tile_bytes + 2 * tb * 4 + dim * 4
    vmem_limit = int(min(max(2 * needed, 32 << 20), capacity * 3 // 4))

    out_row = pl.pallas_call(
        _linear_kernel,
        out_shape=jax.ShapeDtypeStruct((1, main), x.dtype),
        grid=(num_tiles,),
        in_specs=[
            pl.BlockSpec((tb, dim), lambda i: (i, 0)),            # x: tiled over batch
            pl.BlockSpec((1, dim), lambda i: (0, 0)),             # weight: resident
            pl.BlockSpec(memory_space=pltpu.MemorySpace.SMEM),    # bias scalar
        ],
        out_specs=pl.BlockSpec((1, tb), lambda i: (0, i)),         # lane-dense row
        compiler_params=pltpu.CompilerParams(
            dimension_semantics=("parallel",),   # batch tiles shard across TCs (v7x)
            vmem_limit_bytes=vmem_limit,
        ),
        cost_estimate=pl.CostEstimate(
            flops=2 * main * dim,
            bytes_accessed=4 * (main * dim + dim + main),
            transcendentals=0,
        ),
    )(x, weight, b2d)

    out_main = out_row.reshape(main, 1)            # contiguous reshape, no transpose
    if tail == 0:
        return out_main
    out_tail = x[main:] @ weight.T + bias          # < tb rows: tiny XLA dot
    return jnp.concatenate([out_main, out_tail], axis=0)


if __name__ == "__main__":
    key = jax.random.PRNGKey(0)
    kx1, kx2, kx3, kw, kb = jax.random.split(key, 5)

    # Linear regression over `dim` features (nn.Linear default-init style params).
    dim = 256
    bound = 1.0 / (dim ** 0.5)
    weight = jax.random.uniform(kw, (1, dim), jnp.float32, -bound, bound)
    bias = jax.random.uniform(kb, (1,), jnp.float32, -bound, bound)

    def ref_fn(xx):
        return xx @ weight.T + bias

    # 1) Pallas path, non-divisible batch: 2 grid steps of 512 rows + 6-row tail.
    x1 = jax.random.normal(kx1, (1030, dim), dtype=jnp.float32)
    out1 = jax.block_until_ready(linear_forward(x1, weight, bias, small_threshold=0))
    assert out1.shape == (1030, 1)
    assert jnp.allclose(out1, ref_fn(x1), atol=5e-3, rtol=5e-3)

    # 2) Pallas path, evenly divisible batch (no tail).
    x2 = jax.random.normal(kx2, (1024, dim), dtype=jnp.float32)
    out2 = jax.block_until_ready(linear_forward(x2, weight, bias, small_threshold=0))
    assert out2.shape == (1024, 1)
    assert jnp.allclose(out2, ref_fn(x2), atol=5e-3, rtol=5e-3)

    # 3) Default threshold: small input stays on the XLA fast path.
    x3 = jax.random.normal(kx3, (64, dim), dtype=jnp.float32)
    out3 = jax.block_until_ready(linear_forward(x3, weight, bias))
    assert out3.shape == (64, 1)
    assert jnp.allclose(out3, ref_fn(x3), atol=1e-5, rtol=1e-5)

    print("KERNEL_OK")
</pallas_src>

<mosaic_0001>
module attributes {stable_mosaic.version = 11 : i64} {
  func.func @_linear_kernel(%arg0: i32, %arg1: memref<512x256xf32, #tpu.memory_space<vmem>>, %arg2: memref<1x256xf32, #tpu.memory_space<vmem>>, %arg3: memref<1x1xf32, #tpu.memory_space<smem>>, %arg4: memref<1x512xf32, #tpu.memory_space<vmem>>) attributes {dimension_semantics = [#tpu.dimension_semantics<parallel>], iteration_bounds = array<i64: 2>, scalar_prefetch = 0 : i64, scratch_operands = 0 : i64, tpu.core_type = #tpu.core_type<tc>, window_params = [{transform_indices = @transform_0, window_bounds = array<i64: 512, 256>}, {pipeline_mode = #tpu.pipeline_mode<synchronous>, transform_indices = @transform_1, window_bounds = array<i64: 1, 256>}, {transform_indices = @transform_2, window_bounds = array<i64: 1, 1>}, {transform_indices = @transform_3, window_bounds = array<i64: 1, 512>}]} {
    %c0 = arith.constant 0 : index
    %c0_0 = arith.constant 0 : index
    %0 = vector.load %arg2[%c0, %c0_0] : memref<1x256xf32, #tpu.memory_space<vmem>>, vector<1x256xf32>
    %c0_1 = arith.constant 0 : index
    %c0_2 = arith.constant 0 : index
    %1 = vector.load %arg1[%c0_1, %c0_2] : memref<512x256xf32, #tpu.memory_space<vmem>>, vector<512x256xf32>
    %cst = arith.constant dense<0.000000e+00> : vector<1x512xf32>
    %2 = tpu.matmul %0, %1, %cst {dimension_numbers = #tpu.dot_dimension_numbers<[1], [1], [0], [0], [0, 0, 1, 0], [], []>} : vector<1x256xf32>, vector<512x256xf32>, vector<1x512xf32> -> vector<1x512xf32>
    %c0_3 = arith.constant 0 : index
    %c0_4 = arith.constant 0 : index
    %3 = memref.load %arg3[%c0_3, %c0_4] : memref<1x1xf32, #tpu.memory_space<smem>>
    %4 = vector.broadcast %3 : f32 to vector<1x512xf32>
    %5 = arith.addf %2, %4 : vector<1x512xf32>
    %c0_5 = arith.constant 0 : index
    %c0_6 = arith.constant 0 : index
    %6 = vector.load %arg4[%c0_5, %c0_6] : memref<1x512xf32, #tpu.memory_space<vmem>>, vector<1x512xf32>
    tpu.vector_store %arg4[%c0_5, %c0_6], %5 {strides = array<i32>} : memref<1x512xf32, #tpu.memory_space<vmem>>, vector<1x512xf32>,
    return
  }
  func.func @transform_0(%arg0: i32) -> (i32, i32) {
    %c0_i32 = arith.constant 0 : i32
    %c0_i32_0 = arith.constant 0 : i32
    return %arg0, %c0_i32 : i32, i32
  }
  func.func @transform_1(%arg0: i32) -> (i32, i32) {
    %c0_i32 = arith.constant 0 : i32
    %c0_i32_0 = arith.constant 0 : i32
    %c0_i32_1 = arith.constant 0 : i32
    return %c0_i32, %c0_i32_0 : i32, i32
  }
  func.func @transform_2(%arg0: i32) -> (i32, i32) {
    %c0_i32 = arith.constant 0 : i32
    %c0_i32_0 = arith.constant 0 : i32
    %c0_i32_1 = arith.constant 0 : i32
    return %c0_i32, %c0_i32_0 : i32, i32
  }
  func.func @transform_3(%arg0: i32) -> (i32, i32) {
    %c0_i32 = arith.constant 0 : i32
    %c0_i32_0 = arith.constant 0 : i32
    return %c0_i32, %arg0 : i32, i32
  }
}

</mosaic_0001>

<llo_original>
// kernel: linear_forward.1
$region0: #{linear_forward.1}
  #allocation0 [shape = 'u32[]', space=smem, size = 0x4, offset = 0x4, fixed_abs, tag = 'smem constant byte address 0x4 - core index']
  #allocation1 [shape = 'u32[144,128]{1,0:T(1,128)}', space=vmem, size = 0x12000, scoped, tag = 'internal scratch']
  #allocation2 [shape = 'f32[1,1]{1,0:T(1,128)S(6)}', space=smem, size = 0x200, scoped, tag = 'scoped memory for linear_forward.1']
  %s0 = inlined_call_operand.hbm [shape: f32[1030,256], index: 0, kind: input, shape index: {}]
  %s1 = inlined_call_operand.hbm [shape: f32[1,256], index: 1, kind: input, shape index: {}]
  %s2 = inlined_call_operand.<no memory space> [shape: f32[1,1], index: 2, kind: input, shape index: {}]
  %s3 = inlined_call_operand.vmem [shape: f32[1,1024], index: 3, kind: output, shape index: {}]
  %s4 = sld [smem:[#allocation0]]
  $region53: #{linear_forward.1} parent=0
    _
  %s6 = ssub.s32 1, %s4
  %s7 = scalar_select 0, %s6, %s4
  %8 = sst [smem:[#allocation2]] %s2
  $region1: #{linear_forward.1} parent=0
    #allocation3 [shape = 'u8[1048576]{0}', space=vmem, size = 0x100000, scoped, tag = 'input window, operand 0']
    #allocation4 [shape = 's32[2]{0}', space=sflag, size = 0x8, scoped, tag = 'scoped memory for linear_forward.1']
    #allocation5 [shape = 'u8[1024]{0}', space=vmem, size = 0x400, scoped, tag = 'input window, operand 1, single buffered']
    #allocation6 [shape = 's32[1]{0}', space=sflag, size = 0x4, scoped, tag = 'scoped memory for linear_forward.1']
    %9 = vsyncpa [#allocation4], 0
    %s10 = scalar_lea.sflag [#allocation4], 1
    %11 = vsyncpa %s10, 0
    %12 = vsyncpa [#allocation6], 0
    loop: start=0, step=1, limit=4
    $region2: #{linear_forward.1} parent=1 // loop_pre_header
      _
    $region3: #{linear_forward.1} parent=1 // loop_header
      %s14 = sphi 0, %s18
      %p15 = scmp.ge.s32.totalorder %s14, 4
      %s24 = sphi 0, %s26
      %s27 = sphi 0, %s24
      %s28 = sphi 0, %s27
      %s44 = sphi 0, %s28
      %s48 = sphi 0, %s48
      %s50 = sphi 0, %s48
      %s51 = sphi 0, %s50
      %s65 = sphi 0, %s51
      %s69 = sphi 0, %s69
      %s71 = sphi 0, %s69
      %s72 = sphi 0, %s71
      %s86 = sphi 0, %s72
      %s92 = sphi 0, %s94
      %s95 = sphi 0, %s92
      %s96 = sphi 0, %s95
      %s112 = sphi 0, %s96
    $region4: #{linear_forward.1} parent=1 // loop_header_branch
      %17 = sbr.rel (%p15) target = $region8
    $region5: #{linear_forward.1} parent=1 // loop_body
      %s19 = ssub.s32 %s14, 1
      %s20 = ssub.s32 %s14, 2
      %s21 = sadd.s32 %s14, 1
      %s22 = ssub.s32 %s14, %s21
      %p23 = scmp.eq.s32.totalorder %s22, 0
      %s25 = sadd.s32 %s24, 1
      %s26 = scalar_select %p23, %s24, %s25
      %p29 = pneg %p23
      %p30 = scmp.eq.s32.totalorder %s14, 1
      %p31 = por %p29, %p30
      %p32 = scmp.ne.s32.totalorder %s24, %s27
      %p33 = scmp.eq.s32.totalorder %s14, 0
      %p34 = por %p32, %p33
      %p35 = scmp.ne.s32.totalorder %s24, %s27
      %p36 = scmp.eq.s32.totalorder %s19, 1
      %p37 = por %p35, %p36
      %p38 = scmp.ne.s32.totalorder %s27, %s28
      %p39 = scmp.eq.s32.totalorder %s19, 0
      %p40 = por %p38, %p39
      %p41 = scmp.ne.s32.totalorder %s27, %s28
      %p42 = scmp.eq.s32.totalorder %s20, 1
      %p43 = por %p41, %p42
      %p45 = scmp.ne.s32.totalorder %s28, %s44
      %p46 = scmp.eq.s32.totalorder %s20, 0
      %p47 = por %p45, %p46
      %s49 = sadd.s32 %s48, 1
      %p52 = scmp.eq.s32.totalorder %s14, 1
      %p53 = scmp.ne.s32.totalorder %s48, %s50
      %p54 = scmp.eq.s32.totalorder %s14, 0
      %p55 = por %p53, %p54
      %p56 = scmp.ne.s32.totalorder %s48, %s50
      %p57 = scmp.eq.s32.totalorder %s19, 1
      %p58 = por %p56, %p57
      %p59 = scmp.ne.s32.totalorder %s50, %s51
      %p60 = scmp.eq.s32.totalorder %s19, 0
      %p61 = por %p59, %p60
      %p62 = scmp.ne.s32.totalorder %s50, %s51
      %p63 = scmp.eq.s32.totalorder %s20, 1
      %p64 = por %p62, %p63
      %p66 = scmp.ne.s32.totalorder %s51, %s65
      %p67 = scmp.eq.s32.totalorder %s20, 0
      %p68 = por %p66, %p67
      %s70 = sadd.s32 %s69, 1
      %p73 = scmp.eq.s32.totalorder %s14, 1
      %p74 = scmp.ne.s32.totalorder %s69, %s71
      %p75 = scmp.eq.s32.totalorder %s14, 0
      %p76 = por %p74, %p75
      %p77 = scmp.ne.s32.totalorder %s69, %s71
      %p78 = scmp.eq.s32.totalorder %s19, 1
      %p79 = por %p77, %p78
      %p80 = scmp.ne.s32.totalorder %s71, %s72
      %p81 = scmp.eq.s32.totalorder %s19, 0
      %p82 = por %p80, %p81
      %p83 = scmp.ne.s32.totalorder %s71, %s72
      %p84 = scmp.eq.s32.totalorder %s20, 1
      %p85 = por %p83, %p84
      %p87 = scmp.ne.s32.totalorder %s72, %s86
      %p88 = scmp.eq.s32.totalorder %s20, 0
      %p89 = por %p87, %p88
      %s90 = ssub.s32 %s14, %s21
      %p91 = scmp.eq.s32.totalorder %s90, 0
      %s93 = sadd.s32 %s92, 1
      %s94 = scalar_select %p91, %s92, %s93
      %p97 = pneg %p91
      %p98 = scmp.eq.s32.totalorder %s14, 1
      %p99 = por %p97, %p98
      %p100 = scmp.ne.s32.totalorder %s92, %s95
      %p101 = scmp.eq.s32.totalorder %s14, 0
      %p102 = por %p100, %p101
      %p103 = scmp.ne.s32.totalorder %s92, %s95
      %p104 = scmp.eq.s32.totalorder %s19, 1
      %p105 = por %p103, %p104
      %p106 = scmp.ne.s32.totalorder %s95, %s96
      %p107 = scmp.eq.s32.totalorder %s19, 0
      %p108 = por %p106, %p107
      %p109 = scmp.ne.s32.totalorder %s95, %s96
      %p110 = scmp.eq.s32.totalorder %s20, 1
      %p111 = por %p109, %p110
      %p113 = scmp.ne.s32.totalorder %s96, %s112
      %p114 = scmp.eq.s32.totalorder %s20, 0
      %p115 = por %p113, %p114
      %p116 = scmp.le.s32.totalorder 1, %s14
      %p117 = scmp.lt.s32.totalorder %s14, 3
      %p118 = pnand %p116, %p117
      %p119 = pneg %p118
      // Predicated region
      $region9: #{linear_forward.1} parent=5 // pred_check
        _
      $region10: #{linear_forward.1} parent=5 // pred_check_branch
        %121 = sbr.rel (%p118) target = $region12
      $region11: #{linear_forward.1} parent=5 // pred_region
        %s122 = ssub.s32 %s14, 1
        // Predicated region
        $region13: #{linear_forward.1} parent=11 // pred_check
          %p123 = pneg %p61
        $region14: #{linear_forward.1} parent=11 // pred_check_branch
          %125 = sbr.rel (%p123) target = $region16
        $region15: #{linear_forward.1} parent=11 // pred_region
          %s127 = ssub.s32 32, 32
          %128 = vsyncadd [#allocation6], %s127
          %s130 = sshll.u32 [#allocation5], 4
          %s131 = int_to_ptr.vmem [resolvable:$true] %s130
          %133 = dma.hbm_to_vmem [thread:$0]  %s1, 32, %s131, [#allocation6]
        $region16: #{linear_forward.1} parent=11 // pred_fallthru
          _
        // Predicated region
        $region17: #{linear_forward.1} parent=11 // pred_check
          %p134 = pneg %p82
        $region18: #{linear_forward.1} parent=11 // pred_check_branch
          %136 = sbr.rel (%p134) target = $region20
        $region19: #{linear_forward.1} parent=11 // pred_region
          _
        $region20: #{linear_forward.1} parent=11 // pred_fallthru
          _
      $region12: #{linear_forward.1} parent=5 // pred_fallthru
        _
      %p137 = scmp.lt.s32.totalorder %s14, 2
      // Predicated region
      $region21: #{linear_forward.1} parent=5 // pred_check
        %p138 = pneg %p137
      $region22: #{linear_forward.1} parent=5 // pred_check_branch
        %140 = sbr.rel (%p138) target = $region24
      $region23: #{linear_forward.1} parent=5 // pred_region
        // Predicated region
        $region25: #{linear_forward.1} parent=23 // pred_check
          %p141 = pneg %p34
        $region26: #{linear_forward.1} parent=23 // pred_check_branch
          %143 = sbr.rel (%p141) target = $region28
        $region27: #{linear_forward.1} parent=23 // pred_region
          %s144 = sand.u32 %s24, 1
          %s145 = scalar_lea.sflag [#allocation4], %s144
          %s146 = sand.u32 %s24, 1
          %s147 = smul.addr %s146, 1024
          %s148 = scalar_lea.vmem [#allocation3], %s147
          %s149 = smul.u32 64, %s14
          %s150 = ssub.s32 129, %s149
          %p151 = scmp.lt.s32.totalorder %s150, 64
          %s152 = scalar_select %p151, %s150, 64
          %s153 = smul.u32 128, %s152
          %s154 = smul.u32 %s153, 2
          %s156 = ssub.s32 16384, %s154
          %157 = vsyncadd %s145, %s156
          %p158 = scmp.ne.s32.totalorder 0, %s154
          %s159 = smul.addr %s149, 2
          %s160 = smul.addr %s159, 128
          %s161 = scalar_lea.hbm %s0, %s160
          %s162 = smul.u32 16, %s152
          %s163 = sshll.u32 %s148, 4
          %s164 = int_to_ptr.vmem [resolvable:$true] %s163
          %s165 = sshll.u32 %s162, 4
          %169 = dma.hbm_to_vmem [thread:$0]  (%p158), %s161, %s165, %s164, %s145, 256, 256, 16
        $region28: #{linear_forward.1} parent=23 // pred_fallthru
          _
      $region24: #{linear_forward.1} parent=5 // pred_fallthru
        _
      %p170 = scmp.le.s32.totalorder 1, %s14
      %p171 = scmp.lt.s32.totalorder %s14, 3
      %p172 = pnand %p170, %p171
      %p173 = pneg %p172
      // Predicated region
      $region29: #{linear_forward.1} parent=5 // pred_check
        _
      $region30: #{linear_forward.1} parent=5 // pred_check_branch
        %175 = sbr.rel (%p172) target = $region32
      $region31: #{linear_forward.1} parent=5 // pred_region
        %s176 = ssub.s32 %s14, 1
        %s177 = sand.u32 %s27, 1
        %s178 = scalar_lea.sflag [#allocation4], %s177
        %s179 = sand.u32 %s27, 1
        %s180 = smul.addr %s179, 1024
        %s181 = scalar_lea.vmem [#allocation3], %s180
        // Predicated region
        $region33: #{linear_forward.1} parent=31 // pred_check
          %p182 = pneg %p40
        $region34: #{linear_forward.1} parent=31 // pred_check_branch
          %184 = sbr.rel (%p182) target = $region36
        $region35: #{linear_forward.1} parent=31 // pred_region
          %185 = dma.done %s178, 16384
        $region36: #{linear_forward.1} parent=31 // pred_fallthru
          _
        // Predicated region
        $region37: #{linear_forward.1} parent=31 // pred_check
          %p186 = pneg %p61
        $region38: #{linear_forward.1} parent=31 // pred_check_branch
          %188 = sbr.rel (%p186) target = $region40
        $region39: #{linear_forward.1} parent=31 // pred_region
          %189 = dma.done [#allocation6], 32
        $region40: #{linear_forward.1} parent=31 // pred_fallthru
          _
        %s190 = sand.u32 %s27, 1
        %s191 = scalar_lea.sflag [#allocation4], %s190
        %s192 = sand.u32 %s27, 1
        %s193 = smul.addr %s192, 1024
        %s194 = scalar_lea.vmem [#allocation3], %s193
        %p195 = pneg %p40
        %p196 = pneg %p37
        %p197 = pneg %p61
        %p198 = pneg %p58
        %p199 = pneg %p82
        %p200 = pneg %p79
        %p201 = pneg %p108
        %p202 = pneg %p105
        %s203 = smul.u32 4, %s19
        %p204 = scmp.lt.s32.totalorder %s203, 7
        %s205 = scalar_select %p204, %s203, 7
        %s206 = scalar_lea.vmem %s3, %s205
        %s207 = smul.u32 64, %s19
        %s208 = ssub.s32 129, %s207
        %p209 = scmp.lt.s32.totalorder %s208, 64
        %s210 = scalar_select %p209, %s208, 64
        %s211 = smul.u32 128, %s210
        %s212 = smul.u32 %s211, 2
        %s213 = smul.u32 4, %s19
        %p214 = scmp.lt.s32.totalorder %s213, 7
        %s215 = scalar_select %p214, %s213, 7
        %s216 = scalar_lea.vmem %s3, %s215
        %s217 = smul.u32 4, %s19
        %v218 = vld [vmem:[#allocation5] sm:$0x3]
        %v219 = vld [vmem:[%s181] sm:$0xff]
        %v220 = vld [vmem:[%s181 + $0x8] sm:$0xff]
        %v221 = vld [vmem:[%s181 + $0x10] sm:$0xff]
        %v222 = vld [vmem:[%s181 + $0x18] sm:$0xff]
        %v223 = vld [vmem:[%s181 + $0x20] sm:$0xff]
        %v224 = vld [vmem:[%s181 + $0x28] sm:$0xff]
        %v225 = vld [vmem:[%s181 + $0x30] sm:$0xff]
        %v226 = vld [vmem:[%s181 + $0x38] sm:$0xff]
        %v227 = vld [vmem:[%s181 + $0x40] sm:$0xff]
        %v228 = vld [vmem:[%s181 + $0x48] sm:$0xff]
        %v229 = vld [vmem:[%s181 + $0x50] sm:$0xff]
        %v230 = vld [vmem:[%s181 + $0x58] sm:$0xff]
        %v231 = vld [vmem:[%s181 + $0x60] sm:$0xff]
        %v232 = vld [vmem:[%s181 + $0x68] sm:$0xff]
        %v233 = vld [vmem:[%s181 + $0x70] sm:$0xff]
        %v234 = vld [vmem:[%s181 + $0x78] sm:$0xff]
        %v235 = vld [vmem:[%s181 + $0x80] sm:$0xff]
        %v236 = vld [vmem:[%s181 + $0x88] sm:$0xff]
        %v237 = vld [vmem:[%s181 + $0x90] sm:$0xff]
        %v238 = vld [vmem:[%s181 + $0x98] sm:$0xff]
        %v239 = vld [vmem:[%s181 + $0xa0] sm:$0xff]
        %v240 = vld [vmem:[%s181 + $0xa8] sm:$0xff]
        %v241 = vld [vmem:[%s181 + $0xb0] sm:$0xff]
        %v242 = vld [vmem:[%s181 + $0xb8] sm:$0xff]
        %v243 = vld [vmem:[%s181 + $0xc0] sm:$0xff]
        %v244 = vld [vmem:[%s181 + $0xc8] sm:$0xff]
        %v245 = vld [vmem:[%s181 + $0xd0] sm:$0xff]
        %v246 = vld [vmem:[%s181 + $0xd8] sm:$0xff]
        %v247 = vld [vmem:[%s181 + $0xe0] sm:$0xff]
        %v248 = vld [vmem:[%s181 + $0xe8] sm:$0xff]
        %v249 = vld [vmem:[%s181 + $0xf0] sm:$0xff]
        %v250 = vld [vmem:[%s181 + $0xf8] sm:$0xff]
        %v251 = vld [vmem:[%s181 + $0x100] sm:$0xff]
        %v252 = vld [vmem:[%s181 + $0x108] sm:$0xff]
        %v253 = vld [vmem:[%s181 + $0x110] sm:$0xff]
        %v254 = vld [vmem:[%s181 + $0x118] sm:$0xff]
        %v255 = vld [vmem:[%s181 + $0x120] sm:$0xff]
        %v256 = vld [vmem:[%s181 + $0x128] sm:$0xff]
        %v257 = vld [vmem:[%s181 + $0x130] sm:$0xff]
        %v258 = vld [vmem:[%s181 + $0x138] sm:$0xff]
        %v259 = vld [vmem:[%s181 + $0x140] sm:$0xff]
        %v260 = vld [vmem:[%s181 + $0x148] sm:$0xff]
        %v261 = vld [vmem:[%s181 + $0x150] sm:$0xff]
        %v262 = vld [vmem:[%s181 + $0x158] sm:$0xff]
        %v263 = vld [vmem:[%s181 + $0x160] sm:$0xff]
        %v264 = vld [vmem:[%s181 + $0x168] sm:$0xff]
        %v265 = vld [vmem:[%s181 + $0x170] sm:$0xff]
        %v266 = vld [vmem:[%s181 + $0x178] sm:$0xff]
        %v267 = vld [vmem:[%s181 + $0x180] sm:$0xff]
        %v268 = vld [vmem:[%s181 + $0x188] sm:$0xff]
        %v269 = vld [vmem:[%s181 + $0x190] sm:$0xff]
        %v270 = vld [vmem:[%s181 + $0x198] sm:$0xff]
        %v271 = vld [vmem:[%s181 + $0x1a0] sm:$0xff]
        %v272 = vld [vmem:[%s181 + $0x1a8] sm:$0xff]
        %v273 = vld [vmem:[%s181 + $0x1b0] sm:$0xff]
        %v274 = vld [vmem:[%s181 + $0x1b8] sm:$0xff]
        %v275 = vld [vmem:[%s181 + $0x1c0] sm:$0xff]
        %v276 = vld [vmem:[%s181 + $0x1c8] sm:$0xff]
        %v277 = vld [vmem:[%s181 + $0x1d0] sm:$0xff]
        %v278 = vld [vmem:[%s181 + $0x1d8] sm:$0xff]
        %v279 = vld [vmem:[%s181 + $0x1e0] sm:$0xff]
        %v280 = vld [vmem:[%s181 + $0x1e8] sm:$0xff]
        %v281 = vld [vmem:[%s181 + $0x1f0] sm:$0xff]
        %v282 = vld [vmem:[%s181 + $0x1f8] sm:$0xff]
        %v283 = vld [vmem:[%s181 + $0x200] sm:$0xff]
        %v284 = vld [vmem:[%s181 + $0x208] sm:$0xff]
        %v285 = vld [vmem:[%s181 + $0x210] sm:$0xff]
        %v286 = vld [vmem:[%s181 + $0x218] sm:$0xff]
        %v287 = vld [vmem:[%s181 + $0x220] sm:$0xff]
        %v288 = vld [vmem:[%s181 + $0x228] sm:$0xff]
        %v289 = vld [vmem:[%s181 + $0x230] sm:$0xff]
        %v290 = vld [vmem:[%s181 + $0x238] sm:$0xff]
        %v291 = vld [vmem:[%s181 + $0x240] sm:$0xff]
        %v292 = vld [vmem:[%s181 + $0x248] sm:$0xff]
        %v293 = vld [vmem:[%s181 + $0x250] sm:$0xff]
        %v294 = vld [vmem:[%s181 + $0x258] sm:$0xff]
        %v295 = vld [vmem:[%s181 + $0x260] sm:$0xff]
        %v296 = vld [vmem:[%s181 + $0x268] sm:$0xff]
        %v297 = vld [vmem:[%s181 + $0x270] sm:$0xff]
        %v298 = vld [vmem:[%s181 + $0x278] sm:$0xff]
        %v299 = vld [vmem:[%s181 + $0x280] sm:$0xff]
        %v300 = vld [vmem:[%s181 + $0x288] sm:$0xff]
        %v301 = vld [vmem:[%s181 + $0x290] sm:$0xff]
        %v302 = vld [vmem:[%s181 + $0x298] sm:$0xff]
        %v303 = vld [vmem:[%s181 + $0x2a0] sm:$0xff]
        %v304 = vld [vmem:[%s181 + $0x2a8] sm:$0xff]
        %v305 = vld [vmem:[%s181 + $0x2b0] sm:$0xff]
        %v306 = vld [vmem:[%s181 + $0x2b8] sm:$0xff]
        %v307 = vld [vmem:[%s181 + $0x2c0] sm:$0xff]
        %v308 = vld [vmem:[%s181 + $0x2c8] sm:$0xff]
        %v309 = vld [vmem:[%s181 + $0x2d0] sm:$0xff]
        %v310 = vld [vmem:[%s181 + $0x2d8] sm:$0xff]
        %v311 = vld [vmem:[%s181 + $0x2e0] sm:$0xff]
        %v312 = vld [vmem:[%s181 + $0x2e8] sm:$0xff]
        %v313 = vld [vmem:[%s181 + $0x2f0] sm:$0xff]
        %v314 = vld [vmem:[%s181 + $0x2f8] sm:$0xff]
        %v315 = vld [vmem:[%s181 + $0x300] sm:$0xff]
        %v316 = vld [vmem:[%s181 + $0x308] sm:$0xff]
        %v317 = vld [vmem:[%s181 + $0x310] sm:$0xff]
        %v318 = vld [vmem:[%s181 + $0x318] sm:$0xff]
        %v319 = vld [vmem:[%s181 + $0x320] sm:$0xff]
        %v320 = vld [vmem:[%s181 + $0x328] sm:$0xff]
        %v321 = vld [vmem:[%s181 + $0x330] sm:$0xff]
        %v322 = vld [vmem:[%s181 + $0x338] sm:$0xff]
        %v323 = vld [vmem:[%s181 + $0x340] sm:$0xff]
        %v324 = vld [vmem:[%s181 + $0x348] sm:$0xff]
        %v325 = vld [vmem:[%s181 + $0x350] sm:$0xff]
        %v326 = vld [vmem:[%s181 + $0x358] sm:$0xff]
        %v327 = vld [vmem:[%s181 + $0x360] sm:$0xff]
        %v328 = vld [vmem:[%s181 + $0x368] sm:$0xff]
        %v329 = vld [vmem:[%s181 + $0x370] sm:$0xff]
        %v330 = vld [vmem:[%s181 + $0x378] sm:$0xff]
        %v331 = vld [vmem:[%s181 + $0x380] sm:$0xff]
        %v332 = vld [vmem:[%s181 + $0x388] sm:$0xff]
        %v333 = vld [vmem:[%s181 + $0x390] sm:$0xff]
        %v334 = vld [vmem:[%s181 + $0x398] sm:$0xff]
        %v335 = vld [vmem:[%s181 + $0x3a0] sm:$0xff]
        %v336 = vld [vmem:[%s181 + $0x3a8] sm:$0xff]
        %v337 = vld [vmem:[%s181 + $0x3b0] sm:$0xff]
        %v338 = vld [vmem:[%s181 + $0x3b8] sm:$0xff]
        %v339 = vld [vmem:[%s181 + $0x3c0] sm:$0xff]
        %v340 = vld [vmem:[%s181 + $0x3c8] sm:$0xff]
        %v341 = vld [vmem:[%s181 + $0x3d0] sm:$0xff]
        %v342 = vld [vmem:[%s181 + $0x3d8] sm:$0xff]
        %v343 = vld [vmem:[%s181 + $0x3e0] sm:$0xff]
        %v344 = vld [vmem:[%s181 + $0x3e8] sm:$0xff]
        %v345 = vld [vmem:[%s181 + $0x3f0] sm:$0xff]
        %v346 = vld [vmem:[%s181 + $0x3f8] sm:$0xff]
        %s347 = sld [smem:[#allocation2]]
        %v348 = vstv %s347
        %v350 = vlaneseq
        %v351 = vshrl.u32 %v350, 7
        %v352 = vsub.s32 0, %v351
        %v353 = vrot.slane %v218, %v352
        %v354 = vlaneseq
        %v355 = vshrl.u32 %v354, 7
        %v356 = vsub.s32 1, %v355
        %v357 = vrot.slane %v218, %v356
        %360 = vmatprep.subr.mxu0 %v220
        %361 = vmatpush1.xpose.msra.mxu0 %v219
        %362 = vmatprep.subr.mxu0 %v222
        %363 = vmatpush1.xpose.msra.mxu0 %v221
        %364 = vmatprep.subr.mxu0 %v224
        %365 = vmatpush1.xpose.msra.mxu0 %v223
        %366 = vmatprep.subr.mxu0 %v226
        %367 = vmatpush1.xpose.msra.mxu0 %v225
        %368 = vmatprep.subr.mxu0 %v228
        %369 = vmatpush1.xpose.msra.mxu0 %v227
        %370 = vmatprep.subr.mxu0 %v230
        %371 = vmatpush1.xpose.msra.mxu0 %v229
        %372 = vmatprep.subr.mxu0 %v232
        %373 = vmatpush1.xpose.msra.mxu0 %v231
        %374 = vmatprep.subr.mxu0 %v234
        %375 = vmatpush1.xpose.msra.mxu0 %v233
        %376 = vmatprep.subr.mxu0 %v236
        %377 = vmatpush1.xpose.msra.mxu0 %v235
        %378 = vmatprep.subr.mxu0 %v238
        %379 = vmatpush1.xpose.msra.mxu0 %v237
        %380 = vmatprep.subr.mxu0 %v240
        %381 = vmatpush1.xpose.msra.mxu0 %v239
        %382 = vmatprep.subr.mxu0 %v242
        %383 = vmatpush1.xpose.msra.mxu0 %v241
        %384 = vmatprep.subr.mxu0 %v244
        %385 = vmatpush1.xpose.msra.mxu0 %v243
        %386 = vmatprep.subr.mxu0 %v246
        %387 = vmatpush1.xpose.msra.mxu0 %v245
        %388 = vmatprep.subr.mxu0 %v248
        %389 = vmatpush1.xpose.msra.mxu0 %v247
        %390 = vmatprep.subr.mxu0 %v250
        %391 = vmatpush1.xpose.msra.mxu0 %v249
        %392 = vmatprep.subr.mxu0 %v252
        %393 = vmatpush1.xpose.msra.mxu0 %v251
        %394 = vmatprep.subr.mxu0 %v254
        %395 = vmatpush1.xpose.msra.mxu0 %v253
        %396 = vmatprep.subr.mxu0 %v256
        %397 = vmatpush1.xpose.msra.mxu0 %v255
        %398 = vmatprep.subr.mxu0 %v258
        %399 = vmatpush1.xpose.msra.mxu0 %v257
        %400 = vmatprep.subr.mxu0 %v260
        %401 = vmatpush1.xpose.msra.mxu0 %v259
        %402 = vmatprep.subr.mxu0 %v262
        %403 = vmatpush1.xpose.msra.mxu0 %v261
        %404 = vmatprep.subr.mxu0 %v264
        %405 = vmatpush1.xpose.msra.mxu0 %v263
        %406 = vmatprep.subr.mxu0 %v266
        %407 = vmatpush1.xpose.msra.mxu0 %v265
        %408 = vmatprep.subr.mxu0 %v268
        %409 = vmatpush1.xpose.msra.mxu0 %v267
        %410 = vmatprep.subr.mxu0 %v270
        %411 = vmatpush1.xpose.msra.mxu0 %v269
        %412 = vmatprep.subr.mxu0 %v272
        %413 = vmatpush1.xpose.msra.mxu0 %v271
        %414 = vmatprep.subr.mxu0 %v274
        %415 = vmatpush1.xpose.msra.mxu0 %v273
        %416 = vmatprep.subr.mxu0 %v276
        %417 = vmatpush1.xpose.msra.mxu0 %v275
        %418 = vmatprep.subr.mxu0 %v278
        %419 = vmatpush1.xpose.msra.mxu0 %v277
        %420 = vmatprep.subr.mxu0 %v280
        %421 = vmatpush1.xpose.msra.mxu0 %v279
        %422 = vmatprep.subr.mxu0 %v282
        %423 = vmatpush1.xpose.msra.mxu0 %v281
        %424 = vmatprep.mubr.f32.mxu0 %v357
        %425 = vmatmul.mubr.f32.gmra.mrb[0].mxu0 %v353
        %v426 = vpop.f32.mrb[0].mxu0
        %v427 = vadd.f32 %v348, %v426
        %v428 = vpop.f32.mrb[0].mxu0
        %v429 = vadd.f32 %v348, %v428
        %430 = vdwg.mxu0
        %431 = vmatprep.subr.mxu0 %v284
        %432 = vmatpush1.xpose.msra.mxu0 %v283
        %433 = vmatprep.subr.mxu0 %v286
        %434 = vmatpush1.xpose.msra.mxu0 %v285
        %435 = vmatprep.subr.mxu0 %v288
        %436 = vmatpush1.xpose.msra.mxu0 %v287
        %437 = vmatprep.subr.mxu0 %v290
        %438 = vmatpush1.xpose.msra.mxu0 %v289
        %439 = vmatprep.subr.mxu0 %v292
        %440 = vmatpush1.xpose.msra.mxu0 %v291
        %441 = vmatprep.subr.mxu0 %v294
        %442 = vmatpush1.xpose.msra.mxu0 %v293
        %443 = vmatprep.subr.mxu0 %v296
        %444 = vmatpush1.xpose.msra.mxu0 %v295
        %445 = vmatprep.subr.mxu0 %v298
        %446 = vmatpush1.xpose.msra.mxu0 %v297
        %447 = vmatprep.subr.mxu0 %v300
        %448 = vmatpush1.xpose.msra.mxu0 %v299
        %449 = vmatprep.subr.mxu0 %v302
        %450 = vmatpush1.xpose.msra.mxu0 %v301
        %451 = vmatprep.subr.mxu0 %v304
        %452 = vmatpush1.xpose.msra.mxu0 %v303
        %453 = vmatprep.subr.mxu0 %v306
        %454 = vmatpush1.xpose.msra.mxu0 %v305
        %455 = vmatprep.subr.mxu0 %v308
        %456 = vmatpush1.xpose.msra.mxu0 %v307
        %457 = vmatprep.subr.mxu0 %v310
        %458 = vmatpush1.xpose.msra.mxu0 %v309
        %459 = vmatprep.subr.mxu0 %v312
        %460 = vmatpush1.xpose.msra.mxu0 %v311
        %461 = vmatprep.subr.mxu0 %v314
        %462 = vmatpush1.xpose.msra.mxu0 %v313
        %463 = vmatprep.subr.mxu0 %v316
        %464 = vmatpush1.xpose.msra.mxu0 %v315
        %465 = vmatprep.subr.mxu0 %v318
        %466 = vmatpush1.xpose.msra.mxu0 %v317
        %467 = vmatprep.subr.mxu0 %v320
        %468 = vmatpush1.xpose.msra.mxu0 %v319
        %469 = vmatprep.subr.mxu0 %v322
        %470 = vmatpush1.xpose.msra.mxu0 %v321
        %471 = vmatprep.subr.mxu0 %v324
        %472 = vmatpush1.xpose.msra.mxu0 %v323
        %473 = vmatprep.subr.mxu0 %v326
        %474 = vmatpush1.xpose.msra.mxu0 %v325
        %475 = vmatprep.subr.mxu0 %v328
        %476 = vmatpush1.xpose.msra.mxu0 %v327
        %477 = vmatprep.subr.mxu0 %v330
        %478 = vmatpush1.xpose.msra.mxu0 %v329
        %479 = vmatprep.subr.mxu0 %v332
        %480 = vmatpush1.xpose.msra.mxu0 %v331
        %481 = vmatprep.subr.mxu0 %v334
        %482 = vmatpush1.xpose.msra.mxu0 %v333
        %483 = vmatprep.subr.mxu0 %v336
        %484 = vmatpush1.xpose.msra.mxu0 %v335
        %485 = vmatprep.subr.mxu0 %v338
        %486 = vmatpush1.xpose.msra.mxu0 %v337
        %487 = vmatprep.subr.mxu0 %v340
        %488 = vmatpush1.xpose.msra.mxu0 %v339
        %489 = vmatprep.subr.mxu0 %v342
        %490 = vmatpush1.xpose.msra.mxu0 %v341
        %491 = vmatprep.subr.mxu0 %v344
        %492 = vmatpush1.xpose.msra.mxu0 %v343
        %493 = vmatprep.subr.mxu0 %v346
        %494 = vmatpush1.xpose.msra.mxu0 %v345
        %495 = vmatprep.mubr.f32.mxu0 %v357
        %496 = vmatmul.mubr.f32.gmra.mrb[0].mxu0 %v353
        %v497 = vpop.f32.mrb[0].mxu0
        %v498 = vadd.f32 %v348, %v497
        %v499 = vpop.f32.mrb[0].mxu0
        %v500 = vadd.f32 %v348, %v499
        %501 = vdwg.mxu0
        %v506 = vcombine.low %v427, %v429
        %v507 = vcombine.low %v498, %v500
        %v509 = vunpack.c.l.s4 1966171168
        %v510 = vunpack.c.0.s8 %v509
        %v511 = vlaneseq
        %v512 = vshrl.u32 %v511, 7
        %v513 = vsub.s32 %v510, %v512
        %v514 = vrot.slane %v506, %v513
        %v516 = vunpack.c.l.s4 1966171168
        %v517 = vunpack.c.0.s8 %v516
        %v518 = vlaneseq
        %v519 = vshrl.u32 %v518, 7
        %v520 = vsub.s32 %v517, %v519
        %v521 = vrot.slane %v507, %v520
        %v522 = vcombine.low %v514, %v521
        %v524 = vunpack.c.l.s4 1966171168
        %v525 = vunpack.c.0.s8 %v524
        %v526 = vlaneseq
        %v527 = vshrl.u32 %v526, 7
        %v528 = vsub.s32 %v525, %v527
        %v529 = vrot.slane %v522, %v528
        %v531 = vlaneseq
        %vm532 = vcmp.ge.s32.totalorder %v531, 0
        %vm533 = vcmp.lt.s32.totalorder %v531, 512
        %vm534 = vmand %vm532, %vm533
        %535 = vst.msk [vmem:[%s216] sm:$0xf] %vm534, %v529
        %s536 = smul.u32 4, %s19
        %p537 = scmp.lt.s32.totalorder %s536, 7
        %s538 = scalar_select %p537, %s536, 7
        %s539 = scalar_lea.vmem %s3, %s538
        // Predicated region
        $region41: #{linear_forward.1} parent=31 // pred_check
          %p540 = pneg %p105
        $region42: #{linear_forward.1} parent=31 // pred_check_branch
          %542 = sbr.rel (%p540) target = $region44
        $region43: #{linear_forward.1} parent=31 // pred_region
          %s543 = smul.u32 4, %s19
        $region44: #{linear_forward.1} parent=31 // pred_fallthru
          _
      $region32: #{linear_forward.1} parent=5 // pred_fallthru
        _
      %p544 = scmp.le.s32.totalorder 2, %s14
      // Predicated region
      $region45: #{linear_forward.1} parent=5 // pred_check
        %p545 = pneg %p544
      $region46: #{linear_forward.1} parent=5 // pred_check_branch
        %547 = sbr.rel (%p545) target = $region48
      $region47: #{linear_forward.1} parent=5 // pred_region
        %s548 = ssub.s32 %s14, 2
        // Predicated region
        $region49: #{linear_forward.1} parent=47 // pred_check
          %p549 = pneg %p111
        $region50: #{linear_forward.1} parent=47 // pred_check_branch
          %551 = sbr.rel (%p549) target = $region52
        $region51: #{linear_forward.1} parent=47 // pred_region
          %s552 = smul.u32 4, %s20
          %p553 = scmp.lt.s32.totalorder %s552, 7
          %s554 = scalar_select %p553, %s552, 7
          %s555 = scalar_lea.vmem %s3, %s554
        $region52: #{linear_forward.1} parent=47 // pred_fallthru
          _
      $region48: #{linear_forward.1} parent=5 // pred_fallthru
        _
    $region6: #{linear_forward.1} parent=1 // loop_footer
      %s18 = sadd.s32 1, %s14
    $region7: #{linear_forward.1} parent=1 // loop_footer_branch
      %13 = sbr.rel target = $region3
    $region8: #{linear_forward.1} parent=1 // loop_exit
      _
    %556 = vsyncpa [#allocation4], 1
    %s557 = scalar_lea.sflag [#allocation4], 1
    %558 = vsyncpa %s557, 1
    %559 = vsyncpa [#allocation6], 1

</llo_original>
